<compile_context>
chip_gen: v5e
topology: v5e:2x2
jax: 0.10.0
libtpu: 0.0.40
codegen_flags: <defaults>
</compile_context>

<pallas_src>
import jax
import jax.numpy as jnp
from jax.experimental import pallas as pl
from jax.experimental.pallas import tpu as pltpu

_LANE = 128
_SUBLANE = 8


def _round_up(x, m):
    return (x + m - 1) // m * m


def _cdiv(a, b):
    return (a + b - 1) // b


def prepare_params(hidden_w, hidden_b, out_w, out_b):
    """One-time parameter prep (hoisted out of the forward path).

    torch layout in : hidden_w (H, F), hidden_b (H,), out_w (N, H), out_b (N,)
    kernel layout out: w1 (Hpad, F), b1 (Hpad, 1), w2 (N, Hpad), b2 (N, 1)

    The hidden dim is zero-padded to a multiple of 128 lanes; padded rows have zero
    weight and zero bias, ReLU(0)=0, and zero out-weights, so they are inert.
    """
    H, F = hidden_w.shape
    N = out_w.shape[0]
    Hpad = _round_up(H, _LANE)
    w1 = jnp.zeros((Hpad, F), jnp.float32).at[:H, :].set(hidden_w.astype(jnp.float32))
    b1 = jnp.zeros((Hpad, 1), jnp.float32).at[:H, 0].set(hidden_b.astype(jnp.float32))
    w2 = jnp.zeros((N, Hpad), jnp.float32).at[:, :H].set(out_w.astype(jnp.float32))
    b2 = out_b.reshape(N, 1).astype(jnp.float32)
    return w1, b1, w2, b2


def _make_mlp_kernel(bt, chunk):
    # Static chunk schedule over the batch lanes of this tile: keeps the (Hpad, chunk)
    # hidden temporary bounded while the streamed DMA tiles stay large.
    if bt > chunk and bt % chunk == 0:
        spans = tuple((c * chunk, chunk) for c in range(bt // chunk))
    else:
        spans = ((0, bt),)

    def kernel(xt_ref, w1_ref, b1_ref, w2_ref, b2_ref, ot_ref):
        w1 = w1_ref[...]   # (Hpad, F)
        b1 = b1_ref[...]   # (Hpad, 1) broadcasts over batch lanes
        w2 = w2_ref[...]   # (N, Hpad)
        b2 = b2_ref[...]   # (N, 1)   broadcasts over batch lanes
        for off, width in spans:                       # static offsets -> static slices
            x_c = xt_ref[:, off:off + width]           # (F, width), lane-dense
            h = jnp.dot(w1, x_c, preferred_element_type=jnp.float32) + b1
            h = jnp.maximum(h, 0.0)                    # (Hpad, width)
            y = jnp.dot(w2, h, preferred_element_type=jnp.float32) + b2
            ot_ref[:, off:off + width] = y             # (N, width), lane-dense store

    return kernel


def net_forward(x, params, *, block_rows=8192, chunk=2048):
    """relu(x @ hidden_w.T + hidden_b) @ out_w.T + out_b  for x of shape (B, n_feature)."""
    w1, b1, w2, b2 = params
    B, F = x.shape
    Hpad = w1.shape[0]
    N = w2.shape[0]

    # ---- batch tile selection (batch is the lane axis of the transposed pipeline) ----
    if B > block_rows:
        bt = _round_up(block_rows, _LANE)
        # keep >= 2 tiles so the "parallel" axis can shard across both TCs on v7x
        bt = min(bt, _round_up(_cdiv(B, 2), _LANE))
        Bp = _round_up(B, bt)
    else:
        bt = _round_up(B, _SUBLANE)
        Bp = bt
    n_tiles = Bp // bt

    # ---- transposed, zero-padded activation layout: x (B, F) -> xt (F, Bp) ----
    xt = x.T.astype(jnp.float32)
    if Bp != B:
        xt = jnp.zeros((F, Bp), jnp.float32).at[:, :B].set(xt)

    # ---- VMEM budget using *padded* VMEM tile shapes (sublane->8, lane->128) ----
    def _padded_bytes(r, c):
        return _round_up(r, _SUBLANE) * _round_up(c, _LANE) * 4

    chunk_w = chunk if (bt > chunk and bt % chunk == 0) else bt
    streamed = 2 * (_padded_bytes(F, bt) + _padded_bytes(N, bt))              # dbl-buffered x / out tiles
    resident = 2 * (_padded_bytes(Hpad, F) + _padded_bytes(Hpad, 1)
                    + _padded_bytes(N, Hpad) + _padded_bytes(N, 1))           # params (conservatively x2)
    hidden = _padded_bytes(Hpad, chunk_w)                                     # per-chunk hidden temp
    vmem_limit = min(48 * 1024 * 1024,
                     max(16 * 1024 * 1024, 2 * (streamed + resident + hidden)))

    out_t = pl.pallas_call(
        _make_mlp_kernel(bt, chunk),
        out_shape=jax.ShapeDtypeStruct((N, Bp), jnp.float32),
        grid=(n_tiles,),
        in_specs=[
            pl.BlockSpec((F, bt), lambda i: (0, i)),      # streamed lane-dense x tiles
            pl.BlockSpec((Hpad, F), lambda i: (0, 0)),    # W1 resident
            pl.BlockSpec((Hpad, 1), lambda i: (0, 0)),    # b1 resident
            pl.BlockSpec((N, Hpad), lambda i: (0, 0)),    # W2 resident
            pl.BlockSpec((N, 1), lambda i: (0, 0)),       # b2 resident
        ],
        out_specs=pl.BlockSpec((N, bt), lambda i: (0, i)),  # transposed, lane-dense store
        compiler_params=pltpu.CompilerParams(
            dimension_semantics=("parallel",),            # shard batch tiles across TCs (v7x)
            vmem_limit_bytes=vmem_limit,
        ),
    )(xt, w1, b1, w2, b2)

    # Back to torch's (B, n_output) layout (drop batch padding).
    # TODO(synk): consumers that can take the (n_output, B) layout should use out_t
    # directly and skip this extra HBM pass.
    return out_t[:, :B].T


def init_params(key, n_feature, n_hidden, n_output):
    """Deterministic init mimicking torch.nn.Linear default: U(-1/sqrt(fan_in), 1/sqrt(fan_in))."""
    k1, k2, k3, k4 = jax.random.split(key, 4)
    bound1 = 1.0 / jnp.sqrt(jnp.float32(n_feature))
    bound2 = 1.0 / jnp.sqrt(jnp.float32(n_hidden))
    hidden_w = jax.random.uniform(k1, (n_hidden, n_feature), jnp.float32, -bound1, bound1)
    hidden_b = jax.random.uniform(k2, (n_hidden,), jnp.float32, -bound1, bound1)
    out_w = jax.random.uniform(k3, (n_output, n_hidden), jnp.float32, -bound2, bound2)
    out_b = jax.random.uniform(k4, (n_output,), jnp.float32, -bound2, bound2)
    return hidden_w, hidden_b, out_w, out_b


if __name__ == "__main__":
    # Iris-like sizes: 4 features, 32 hidden, 3 classes.
    n_feature, n_hidden, n_output = 4, 32, 3

    key = jax.random.PRNGKey(0)
    kx, kp, kx2 = jax.random.split(key, 3)
    hidden_w, hidden_b, out_w, out_b = init_params(kp, n_feature, n_hidden, n_output)

    # One-time parameter prep, hoisted out of the forward path.
    params = jax.tree_util.tree_map(jax.block_until_ready,
                                    prepare_params(hidden_w, hidden_b, out_w, out_b))

    def ref_fn(xx):
        return jnp.maximum(xx @ hidden_w.T + hidden_b, 0.0) @ out_w.T + out_b

    fwd = jax.jit(net_forward, static_argnames=("block_rows", "chunk"))

    # 1) Small iris-sized batch (single full-extent tile).
    x_small = jax.random.normal(kx, (8, n_feature), jnp.float32)
    out_small = jax.block_until_ready(fwd(x_small, params))
    assert out_small.shape == (8, n_output)
    assert jnp.allclose(out_small, ref_fn(x_small), atol=1e-4, rtol=1e-4)

    # 2) Larger batch, default config (single big tile, batch not multiple of 8 lanes... still one tile).
    x_big = jax.random.normal(kx2, (1040, n_feature), jnp.float32)
    out_big = jax.block_until_ready(fwd(x_big, params))
    assert out_big.shape == (1040, n_output)
    assert jnp.allclose(out_big, ref_fn(x_big), atol=1e-4, rtol=1e-4)

    # 3) Same data with small tiles to exercise the multi-tile grid, batch padding and
    #    in-kernel chunking paths (block_rows=256 -> 5 tiles of 256, chunk=128 -> 2 chunks/tile).
    out_grid = jax.block_until_ready(fwd(x_big, params, block_rows=256, chunk=128))
    assert out_grid.shape == (1040, n_output)
    assert jnp.allclose(out_grid, ref_fn(x_big), atol=1e-4, rtol=1e-4)

    print("KERNEL_OK")
</pallas_src>

<mosaic_0001>
module attributes {stable_mosaic.version = 11 : i64} {
  func.func @kernel(%arg0: i32, %arg1: memref<4x8xf32, #tpu.memory_space<vmem>>, %arg2: memref<128x4xf32, #tpu.memory_space<vmem>>, %arg3: memref<128x1xf32, #tpu.memory_space<vmem>>, %arg4: memref<3x128xf32, #tpu.memory_space<vmem>>, %arg5: memref<3x1xf32, #tpu.memory_space<vmem>>, %arg6: memref<3x8xf32, #tpu.memory_space<vmem>>) attributes {dimension_semantics = [#tpu.dimension_semantics<parallel>], iteration_bounds = array<i64: 1>, scalar_prefetch = 0 : i64, scratch_operands = 0 : i64, tpu.core_type = #tpu.core_type<tc>, window_params = [{transform_indices = @transform_0, window_bounds = array<i64: 4, 8>}, {pipeline_mode = #tpu.pipeline_mode<synchronous>, transform_indices = @transform_1, window_bounds = array<i64: 128, 4>}, {pipeline_mode = #tpu.pipeline_mode<synchronous>, transform_indices = @transform_2, window_bounds = array<i64: 128, 1>}, {pipeline_mode = #tpu.pipeline_mode<synchronous>, transform_indices = @transform_3, window_bounds = array<i64: 3, 128>}, {pipeline_mode = #tpu.pipeline_mode<synchronous>, transform_indices = @transform_4, window_bounds = array<i64: 3, 1>}, {transform_indices = @transform_5, window_bounds = array<i64: 3, 8>}]} {
    %c0 = arith.constant 0 : index
    %c0_0 = arith.constant 0 : index
    %0 = vector.load %arg2[%c0, %c0_0] : memref<128x4xf32, #tpu.memory_space<vmem>>, vector<128x4xf32>
    %c0_1 = arith.constant 0 : index
    %c0_2 = arith.constant 0 : index
    %1 = vector.load %arg3[%c0_1, %c0_2] : memref<128x1xf32, #tpu.memory_space<vmem>>, vector<128x1xf32>
    %c0_3 = arith.constant 0 : index
    %c0_4 = arith.constant 0 : index
    %2 = vector.load %arg4[%c0_3, %c0_4] : memref<3x128xf32, #tpu.memory_space<vmem>>, vector<3x128xf32>
    %c0_5 = arith.constant 0 : index
    %c0_6 = arith.constant 0 : index
    %3 = vector.load %arg5[%c0_5, %c0_6] : memref<3x1xf32, #tpu.memory_space<vmem>>, vector<3x1xf32>
    %c0_7 = arith.constant 0 : index
    %c0_8 = arith.constant 0 : index
    %4 = vector.load %arg1[%c0_7, %c0_8] : memref<4x8xf32, #tpu.memory_space<vmem>>, vector<4x8xf32>
    %cst = arith.constant dense<0.000000e+00> : vector<128x8xf32>
    %5 = tpu.matmul %0, %4, %cst {dimension_numbers = #tpu.dot_dimension_numbers<[1], [0], [0], [1], [0, 0, 1, 1], [], []>} : vector<128x4xf32>, vector<4x8xf32>, vector<128x8xf32> -> vector<128x8xf32>
    %6 = vector.broadcast %1 : vector<128x1xf32> to vector<128x8xf32>
    %7 = arith.addf %5, %6 : vector<128x8xf32>
    %cst_9 = arith.constant 0.000000e+00 : f32
    %8 = vector.broadcast %cst_9 : f32 to vector<128x8xf32>
    %9 = arith.maximumf %7, %8 : vector<128x8xf32>
    %cst_10 = arith.constant dense<0.000000e+00> : vector<3x8xf32>
    %10 = tpu.matmul %2, %9, %cst_10 {dimension_numbers = #tpu.dot_dimension_numbers<[1], [0], [0], [1], [0, 0, 1, 1], [], []>} : vector<3x128xf32>, vector<128x8xf32>, vector<3x8xf32> -> vector<3x8xf32>
    %11 = vector.broadcast %3 : vector<3x1xf32> to vector<3x8xf32>
    %12 = arith.addf %10, %11 : vector<3x8xf32>
    %c0_11 = arith.constant 0 : index
    %c0_12 = arith.constant 0 : index
    %13 = vector.load %arg6[%c0_11, %c0_12] : memref<3x8xf32, #tpu.memory_space<vmem>>, vector<3x8xf32>
    tpu.vector_store %arg6[%c0_11, %c0_12], %12 {strides = array<i32>} : memref<3x8xf32, #tpu.memory_space<vmem>>, vector<3x8xf32>,
    return
  }
  func.func @transform_0(%arg0: i32) -> (i32, i32) {
    %c0_i32 = arith.constant 0 : i32
    %c0_i32_0 = arith.constant 0 : i32
    return %c0_i32, %arg0 : i32, i32
  }
  func.func @transform_1(%arg0: i32) -> (i32, i32) {
    %c0_i32 = arith.constant 0 : i32
    %c0_i32_0 = arith.constant 0 : i32
    %c0_i32_1 = arith.constant 0 : i32
    return %c0_i32, %c0_i32_0 : i32, i32
  }
  func.func @transform_2(%arg0: i32) -> (i32, i32) {
    %c0_i32 = arith.constant 0 : i32
    %c0_i32_0 = arith.constant 0 : i32
    %c0_i32_1 = arith.constant 0 : i32
    return %c0_i32, %c0_i32_0 : i32, i32
  }
  func.func @transform_3(%arg0: i32) -> (i32, i32) {
    %c0_i32 = arith.constant 0 : i32
    %c0_i32_0 = arith.constant 0 : i32
    %c0_i32_1 = arith.constant 0 : i32
    return %c0_i32, %c0_i32_0 : i32, i32
  }
  func.func @transform_4(%arg0: i32) -> (i32, i32) {
    %c0_i32 = arith.constant 0 : i32
    %c0_i32_0 = arith.constant 0 : i32
    %c0_i32_1 = arith.constant 0 : i32
    return %c0_i32, %c0_i32_0 : i32, i32
  }
  func.func @transform_5(%arg0: i32) -> (i32, i32) {
    %c0_i32 = arith.constant 0 : i32
    %c0_i32_0 = arith.constant 0 : i32
    return %c0_i32, %arg0 : i32, i32
  }
}

</mosaic_0001>

<llo_original>
// kernel: net_forward.1
$region0: #{net_forward.1}
  #allocation0 [shape = 'u32[]', space=smem, size = 0x4, offset = 0x4, fixed_abs, tag = 'smem constant byte address 0x4 - core index']
  #allocation1 [shape = 'u32[72,128]{1,0:T(1,128)}', space=vmem, size = 0x9000, scoped, tag = 'internal scratch']
  %s0 = inlined_call_operand.vmem [shape: f32[4,8], index: 0, kind: input, shape index: {}]
  %s1 = inlined_call_operand.vmem [shape: f32[128,4], index: 1, kind: input, shape index: {}]
  %s2 = inlined_call_operand.vmem [shape: f32[128,1], index: 2, kind: input, shape index: {}]
  %s3 = inlined_call_operand.vmem [shape: f32[3,128], index: 3, kind: input, shape index: {}]
  %s4 = inlined_call_operand.vmem [shape: f32[3,1], index: 4, kind: input, shape index: {}]
  %s5 = inlined_call_operand.hbm [shape: f32[3,8], index: 5, kind: output, shape index: {}]
  %s6 = sld [smem:[#allocation0]]
  $region30: #{net_forward.1} parent=0
    _
  %s8 = ssub.s32 1, %s6
  %s9 = scalar_select 0, %s8, %s6
  $region1: #{net_forward.1} parent=0
    #allocation2 [shape = 'u8[2048]{0}', space=vmem, size = 0x800, scoped, tag = 'output window, operand 0, single buffered']
    #allocation3 [shape = 's32[1]{0}', space=sflag, size = 0x4, scoped, tag = 'scoped memory for net_forward.1']
    %10 = vsyncpa [#allocation3], 0
    // Predicated region
    $region2: #{net_forward.1} parent=1 // pred_check
      _
    $region3: #{net_forward.1} parent=1 // pred_check_branch
      %12 = sbr.rel (0) target = $region5
    $region4: #{net_forward.1} parent=1 // pred_region
      _
    $region5: #{net_forward.1} parent=1 // pred_fallthru
      _
    // Predicated region
    $region6: #{net_forward.1} parent=1 // pred_check
      _
    $region7: #{net_forward.1} parent=1 // pred_check_branch
      %14 = sbr.rel (0) target = $region9
    $region8: #{net_forward.1} parent=1 // pred_region
      _
    $region9: #{net_forward.1} parent=1 // pred_fallthru
      _
    // Predicated region
    $region10: #{net_forward.1} parent=1 // pred_check
      _
    $region11: #{net_forward.1} parent=1 // pred_check_branch
      %16 = sbr.rel (0) target = $region13
    $region12: #{net_forward.1} parent=1 // pred_region
      _
    $region13: #{net_forward.1} parent=1 // pred_fallthru
      _
    // Predicated region
    $region14: #{net_forward.1} parent=1 // pred_check
      _
    $region15: #{net_forward.1} parent=1 // pred_check_branch
      %18 = sbr.rel (0) target = $region17
    $region16: #{net_forward.1} parent=1 // pred_region
      _
    $region17: #{net_forward.1} parent=1 // pred_fallthru
      _
    // Predicated region
    $region18: #{net_forward.1} parent=1 // pred_check
      _
    $region19: #{net_forward.1} parent=1 // pred_check_branch
      %20 = sbr.rel (0) target = $region21
    $region20: #{net_forward.1} parent=1 // pred_region
      _
    $region21: #{net_forward.1} parent=1 // pred_fallthru
      _
    %v21 = vld [vmem:[%s1] sm:$0xff]
    %v22 = vld [vmem:[%s1 + $0x8] sm:$0xff]
    %v23 = vld [vmem:[%s1 + $0x10] sm:$0xff]
    %v24 = vld [vmem:[%s1 + $0x18] sm:$0xff]
    %v25 = vld [vmem:[%s1 + $0x20] sm:$0xff]
    %v26 = vld [vmem:[%s1 + $0x28] sm:$0xff]
    %v27 = vld [vmem:[%s1 + $0x30] sm:$0xff]
    %v28 = vld [vmem:[%s1 + $0x38] sm:$0xff]
    %v29 = vld [vmem:[%s1 + $0x40] sm:$0xff]
    %v30 = vld [vmem:[%s1 + $0x48] sm:$0xff]
    %v31 = vld [vmem:[%s1 + $0x50] sm:$0xff]
    %v32 = vld [vmem:[%s1 + $0x58] sm:$0xff]
    %v33 = vld [vmem:[%s1 + $0x60] sm:$0xff]
    %v34 = vld [vmem:[%s1 + $0x68] sm:$0xff]
    %v35 = vld [vmem:[%s1 + $0x70] sm:$0xff]
    %v36 = vld [vmem:[%s1 + $0x78] sm:$0xff]
    %v37 = vld [vmem:[%s2] sm:$0xff]
    %v38 = vld [vmem:[%s2 + $0x8] sm:$0xff]
    %v39 = vld [vmem:[%s2 + $0x10] sm:$0xff]
    %v40 = vld [vmem:[%s2 + $0x18] sm:$0xff]
    %v41 = vld [vmem:[%s2 + $0x20] sm:$0xff]
    %v42 = vld [vmem:[%s2 + $0x28] sm:$0xff]
    %v43 = vld [vmem:[%s2 + $0x30] sm:$0xff]
    %v44 = vld [vmem:[%s2 + $0x38] sm:$0xff]
    %v45 = vld [vmem:[%s2 + $0x40] sm:$0xff]
    %v46 = vld [vmem:[%s2 + $0x48] sm:$0xff]
    %v47 = vld [vmem:[%s2 + $0x50] sm:$0xff]
    %v48 = vld [vmem:[%s2 + $0x58] sm:$0xff]
    %v49 = vld [vmem:[%s2 + $0x60] sm:$0xff]
    %v50 = vld [vmem:[%s2 + $0x68] sm:$0xff]
    %v51 = vld [vmem:[%s2 + $0x70] sm:$0xff]
    %v52 = vld [vmem:[%s2 + $0x78] sm:$0xff]
    %v53 = vld [vmem:[%s3] sm:$0x7]
    %v54 = vld [vmem:[%s4] sm:$0x7]
    %v55 = vld [vmem:[%s0] sm:$0xf]
    %57 = vset.pattern.permute.xlu0 0
    %58 = vperm.xlu0 %57, %v37
    %v59 = vpop.permute.xlu0 %58
    %62 = vset.pattern.permute.xlu0 0
    %63 = vperm.xlu0 %62, %v38
    %v64 = vpop.permute.xlu0 %63
    %67 = vset.pattern.permute.xlu0 0
    %68 = vperm.xlu0 %67, %v39
    %v69 = vpop.permute.xlu0 %68
    %72 = vset.pattern.permute.xlu0 0
    %73 = vperm.xlu0 %72, %v40
    %v74 = vpop.permute.xlu0 %73
    %77 = vset.pattern.permute.xlu0 0
    %78 = vperm.xlu0 %77, %v41
    %v79 = vpop.permute.xlu0 %78
    %82 = vset.pattern.permute.xlu0 0
    %83 = vperm.xlu0 %82, %v42
    %v84 = vpop.permute.xlu0 %83
    %87 = vset.pattern.permute.xlu0 0
    %88 = vperm.xlu0 %87, %v43
    %v89 = vpop.permute.xlu0 %88
    %92 = vset.pattern.permute.xlu0 0
    %93 = vperm.xlu0 %92, %v44
    %v94 = vpop.permute.xlu0 %93
    %97 = vset.pattern.permute.xlu0 0
    %98 = vperm.xlu0 %97, %v45
    %v99 = vpop.permute.xlu0 %98
    %102 = vset.pattern.permute.xlu0 0
    %103 = vperm.xlu0 %102, %v46
    %v104 = vpop.permute.xlu0 %103
    %107 = vset.pattern.permute.xlu0 0
    %108 = vperm.xlu0 %107, %v47
    %v109 = vpop.permute.xlu0 %108
    %112 = vset.pattern.permute.xlu0 0
    %113 = vperm.xlu0 %112, %v48
    %v114 = vpop.permute.xlu0 %113
    %117 = vset.pattern.permute.xlu0 0
    %118 = vperm.xlu0 %117, %v49
    %v119 = vpop.permute.xlu0 %118
    %122 = vset.pattern.permute.xlu0 0
    %123 = vperm.xlu0 %122, %v50
    %v124 = vpop.permute.xlu0 %123
    %127 = vset.pattern.permute.xlu0 0
    %128 = vperm.xlu0 %127, %v51
    %v129 = vpop.permute.xlu0 %128
    %132 = vset.pattern.permute.xlu0 0
    %133 = vperm.xlu0 %132, %v52
    %v134 = vpop.permute.xlu0 %133
    %vm136 = vcmask 31744
    %v138 = vsel %vm136, %v21, 0
    %v141 = vsel %vm136, %v22, 0
    %v144 = vsel %vm136, %v23, 0
    %v147 = vsel %vm136, %v24, 0
    %v150 = vsel %vm136, %v25, 0
    %v153 = vsel %vm136, %v26, 0
    %v156 = vsel %vm136, %v27, 0
    %v159 = vsel %vm136, %v28, 0
    %v162 = vsel %vm136, %v29, 0
    %v165 = vsel %vm136, %v30, 0
    %v168 = vsel %vm136, %v31, 0
    %v171 = vsel %vm136, %v32, 0
    %v174 = vsel %vm136, %v33, 0
    %v177 = vsel %vm136, %v34, 0
    %v180 = vsel %vm136, %v35, 0
    %v183 = vsel %vm136, %v36, 0
    %vm185 = vcmask 1043456
    %v187 = vsel %vm185, %v55, 0
    %189 = vmatpush.msra.mxu0 0.0
    %190 = vmatpush.msra.mxu0 0.0
    %191 = vmatpush.msra.mxu0 0.0
    %192 = vmatpush.msra.mxu0 0.0
    %193 = vmatpush.msra.mxu0 0.0
    %194 = vmatpush.msra.mxu0 0.0
    %195 = vmatpush.msra.mxu0 0.0
    %196 = vmatpush.msra.mxu0 0.0
    %197 = vmatpush.msra.mxu0 0.0
    %198 = vmatpush.msra.mxu0 0.0
    %199 = vmatpush.msra.mxu0 0.0
    %200 = vmatpush.msra.mxu0 0.0
    %201 = vmatpush.msra.mxu0 0.0
    %202 = vmatpush.msra.mxu0 0.0
    %203 = vmatpush.msra.mxu0 0.0
    %204 = vmatpush.msra.mxu0 %v187
    %205 = vmatmul.f32.gmra.mxu0 %v138
    %v206 = vpop.f32.mrf.mxu0
    %v207 = vadd.f32 %v59, %v206
    %208 = vmatmul.f32.gmra.mxu0 %v141
    %v209 = vpop.f32.mrf.mxu0
    %v210 = vadd.f32 %v64, %v209
    %211 = vmatmul.f32.gmra.mxu0 %v144
    %v212 = vpop.f32.mrf.mxu0
    %v213 = vadd.f32 %v69, %v212
    %214 = vmatmul.f32.gmra.mxu0 %v147
    %v215 = vpop.f32.mrf.mxu0
    %v216 = vadd.f32 %v74, %v215
    %217 = vmatmul.f32.gmra.mxu0 %v150
    %v218 = vpop.f32.mrf.mxu0
    %v219 = vadd.f32 %v79, %v218
    %220 = vmatmul.f32.gmra.mxu0 %v153
    %v221 = vpop.f32.mrf.mxu0
    %v222 = vadd.f32 %v84, %v221
    %223 = vmatmul.f32.gmra.mxu0 %v156
    %v224 = vpop.f32.mrf.mxu0
    %v225 = vadd.f32 %v89, %v224
    %226 = vmatmul.f32.gmra.mxu0 %v159
    %v227 = vpop.f32.mrf.mxu0
    %v228 = vadd.f32 %v94, %v227
    %229 = vmatmul.f32.gmra.mxu0 %v162
    %v230 = vpop.f32.mrf.mxu0
    %v231 = vadd.f32 %v99, %v230
    %232 = vmatmul.f32.gmra.mxu0 %v165
    %v233 = vpop.f32.mrf.mxu0
    %v234 = vadd.f32 %v104, %v233
    %235 = vmatmul.f32.gmra.mxu0 %v168
    %v236 = vpop.f32.mrf.mxu0
    %v237 = vadd.f32 %v109, %v236
    %238 = vmatmul.f32.gmra.mxu0 %v171
    %v239 = vpop.f32.mrf.mxu0
    %v240 = vadd.f32 %v114, %v239
    %241 = vmatmul.f32.gmra.mxu0 %v174
    %v242 = vpop.f32.mrf.mxu0
    %v243 = vadd.f32 %v119, %v242
    %244 = vmatmul.f32.gmra.mxu0 %v177
    %v245 = vpop.f32.mrf.mxu0
    %v246 = vadd.f32 %v124, %v245
    %247 = vmatmul.f32.gmra.mxu0 %v180
    %v248 = vpop.f32.mrf.mxu0
    %v249 = vadd.f32 %v129, %v248
    %250 = vmatmul.f32.gmra.mxu0 %v183
    %v251 = vpop.f32.mrf.mxu0
    %v252 = vadd.f32 %v134, %v251
    %253 = vdwg.mxu0
    %v254 = vmax.f32 %v207, 0.0
    %v255 = vmax.f32 %v210, 0.0
    %v256 = vmax.f32 %v213, 0.0
    %v257 = vmax.f32 %v216, 0.0
    %v258 = vmax.f32 %v219, 0.0
    %v259 = vmax.f32 %v222, 0.0
    %v260 = vmax.f32 %v225, 0.0
    %v261 = vmax.f32 %v228, 0.0
    %v262 = vmax.f32 %v231, 0.0
    %v263 = vmax.f32 %v234, 0.0
    %v264 = vmax.f32 %v237, 0.0
    %v265 = vmax.f32 %v240, 0.0
    %v266 = vmax.f32 %v243, 0.0
    %v267 = vmax.f32 %v246, 0.0
    %v268 = vmax.f32 %v249, 0.0
    %v269 = vmax.f32 %v252, 0.0
    %271 = vset.pattern.permute.xlu0 0
    %272 = vperm.xlu0 %271, %v54
    %v273 = vpop.permute.xlu0 %272
    %275 = vmatpush.msra.mxu0 %v269
    %276 = vmatpush.msra.mxu0 %v268
    %277 = vmatpush.msra.mxu0 %v267
    %278 = vmatpush.msra.mxu0 %v266
    %279 = vmatpush.msra.mxu0 %v265
    %280 = vmatpush.msra.mxu0 %v264
    %281 = vmatpush.msra.mxu0 %v263
    %282 = vmatpush.msra.mxu0 %v262
    %283 = vmatpush.msra.mxu0 %v261
    %284 = vmatpush.msra.mxu0 %v260
    %285 = vmatpush.msra.mxu0 %v259
    %286 = vmatpush.msra.mxu0 %v258
    %287 = vmatpush.msra.mxu0 %v257
    %288 = vmatpush.msra.mxu0 %v256
    %289 = vmatpush.msra.mxu0 %v255
    %290 = vmatpush.msra.mxu0 %v254
    %291 = vmatmul.f32.gmra.mxu0 %v53
    %v292 = vpop.f32.mrf.mxu0
    %v293 = vadd.f32 %v273, %v292
    %294 = vdwg.mxu0
    %vm295 = vcmask 59392
    %296 = vst.msk [vmem:[#allocation2] sm:$0x7] %vm295, %v293
    // Predicated region
    $region22: #{net_forward.1} parent=1 // pred_check
      _
    $region23: #{net_forward.1} parent=1 // pred_check_branch
      %298 = sbr.rel (0) target = $region25
    $region24: #{net_forward.1} parent=1 // pred_region
      %300 = vsyncadd [#allocation3], 0
      %s302 = sshll.u32 [#allocation2], 4
      %s303 = int_to_ptr.vmem [resolvable:$true] %s302
      %s304 = sshll.u32 %s5, 4
      %s305 = int_to_ptr.hbm [resolvable:$true] %s304
      %307 = dma.vmem_to_hbm [thread:$0]  %s303, 64, %s305, [#allocation3]
    $region25: #{net_forward.1} parent=1 // pred_fallthru
      _
    // Predicated region
    $region26: #{net_forward.1} parent=1 // pred_check
      _
    $region27: #{net_forward.1} parent=1 // pred_check_branch
      %309 = sbr.rel (0) target = $region29
    $region28: #{net_forward.1} parent=1 // pred_region
      %311 = dma.done [#allocation3], 64
    $region29: #{net_forward.1} parent=1 // pred_fallthru
      _
    %312 = vsyncpa [#allocation3], 1

</llo_original>
